<compile_context>
chip_gen: v5e
topology: v5e:2x2
jax: 0.10.0
libtpu: 0.0.40
codegen_flags: <defaults>
</compile_context>

<pallas_src>
import math

import numpy as np
import jax
import jax.numpy as jnp
from jax import lax
from jax.experimental import pallas as pl
from jax.experimental.pallas import tpu as pltpu

# ---------------------------------------------------------------------------
# Model hyperparameters
# ---------------------------------------------------------------------------
B = 2          # batch
LQ = 8         # nodes sequence length (query)
LK = 8         # questions sequence length (key / value)
E = 32         # embed_dim
H = 4          # num_heads
DH = E // H    # head dim
FF = 64        # ff_dim
EPS = 1e-5
NEG_INF = -1e9

BLQ = B * LQ           # 16  query rows
BLK = B * LK           # 16  key/value rows
HBL = H * B * LK       # 64  score columns, ordered (head, batch, key)
EV = E + LK            # 40  [concat head outputs | head-averaged attn weights]
WIN = 3 * E + LK       # 104 fused in-projection output width ([q|k|v|ones])

# ----- constant/weight slab layout (rows, lane width = WIN) -----------------
R_WQKV = 0                     # (E, WIN)  fused in-proj weight (pre-transposed, q pre-scaled)
R_WO = R_WQKV + E              # (E, E)    out-proj weight^T
R_W1 = R_WO + E                # (E, FF)   ffn linear1 weight^T
R_W2 = R_W1 + E                # (FF, E)   ffn linear2 weight^T
R_VMASK = R_W2 + FF            # (HBL, EV) block-diagonal head mask (+ (1/H)*I columns)
R_SEG = R_VMASK + HBL          # (HBL, HBL) block-diagonal ones (segmented softmax sums)
R_VEC = R_SEG + HBL            # (8, WIN)  biases + LayerNorm params
SLAB_R = R_VEC + 8             # 296 rows total
SLAB_W = WIN                   # 104

V_BIN, V_BO, V_G1, V_BE1, V_B1, V_B2, V_G2, V_BE2 = range(8)

# ----- per-call data slab: [nodes(16) ; questions(16) ; additive mask(16)] --
DATA_R = BLQ + BLK + BLQ       # 48
DATA_W = HBL                   # 64

# ----- precomputed constants (numpy, module init) ----------------------------
_qrow_batch = np.arange(BLQ) // LQ                       # batch of each query row
_kcol_batch = (np.arange(HBL) % BLK) // LK               # batch of each score column
OFFBATCH = jnp.asarray(
    np.where(_qrow_batch[:, None] != _kcol_batch[None, :], NEG_INF, 0.0).astype(np.float32))

_r = np.arange(HBL)
_vmask_np = np.zeros((HBL, EV), np.float32)
_vmask_np[:, :E] = (np.arange(E)[None, :] // DH == _r[:, None] // BLK)       # head block mask
_vmask_np[:, E:] = (1.0 / H) * ((_r[:, None] % LK) == np.arange(LK)[None, :])  # (1/H)*I_LK tiled
_ones_seg_np = (_r[:, None] // LK == _r[None, :] // LK).astype(np.float32)   # (64, 64)


def _layernorm(x, gamma, beta):
    mu = jnp.mean(x, axis=-1, keepdims=True)
    var = jnp.mean((x - mu) ** 2, axis=-1, keepdims=True)
    return (x - mu) * lax.rsqrt(var + EPS) * gamma + beta


# ---------------------------------------------------------------------------
# Pallas kernel: whole block, whole batch, one invocation, zero scratch.
# ---------------------------------------------------------------------------
def cross_attn_kernel(data_ref, wts_ref, out_ref):
    stacked = data_ref[0:BLQ + BLK, 0:E]          # (32, 32)  [nodes ; questions]
    big_mask = data_ref[BLQ + BLK:DATA_R, :]      # (16, 64)  key-padding + off-batch (-1e9)

    wqkv_t = wts_ref[R_WQKV:R_WQKV + E, :]        # (32, 104)
    wo_t = wts_ref[R_WO:R_WO + E, 0:E]            # (32, 32)
    w1_t = wts_ref[R_W1:R_W1 + E, 0:FF]           # (32, 64)
    w2_t = wts_ref[R_W2:R_W2 + FF, 0:E]           # (64, 32)
    vmask = wts_ref[R_VMASK:R_VMASK + HBL, 0:EV]  # (64, 40)
    ones_seg = wts_ref[R_SEG:R_SEG + HBL, 0:HBL]  # (64, 64)
    vec = wts_ref[R_VEC:R_VEC + 8, :]             # (8, 104)

    b_in = vec[V_BIN:V_BIN + 1, :]                # (1, 104) fused in-proj bias (+ ones pad)
    bo = vec[V_BO:V_BO + 1, 0:E]
    g1, be1 = vec[V_G1:V_G1 + 1, 0:E], vec[V_BE1:V_BE1 + 1, 0:E]
    b1 = vec[V_B1:V_B1 + 1, 0:FF]
    b2 = vec[V_B2:V_B2 + 1, 0:E]
    g2, be2 = vec[V_G2:V_G2 + 1, 0:E], vec[V_BE2:V_BE2 + 1, 0:E]

    # --- fused Q|K|V projection: one matmul on the stacked slab -------------
    proj = jnp.dot(stacked, wqkv_t, preferred_element_type=jnp.float32) + b_in   # (32, 104)
    q = proj[0:BLQ, 0:E]                              # (16, 32)  (already 1/sqrt(DH)-scaled)
    k = proj[BLQ:BLQ + BLK, E:2 * E]                  # (16, 32)
    v_ext = proj[BLQ:BLQ + BLK, 2 * E:2 * E + EV]     # (16, 40)  [v | exact ones]

    # --- block-diagonal (head, batch) packing, rows ordered (h, b, j) --------
    k_big = jnp.concatenate([k] * H, axis=0) * vmask[:, 0:E]       # (64, 32)
    v_big = jnp.concatenate([v_ext] * H, axis=0) * vmask           # (64, 40)

    # --- all attention scores in ONE MXU pass --------------------------------
    s = lax.dot_general(q, k_big, (((1,), (1,)), ((), ())),
                        preferred_element_type=jnp.float32) + big_mask            # (16, 64)

    # --- softmax per (head, batch) block of LK columns -----------------------
    # Global row max is exact (softmax is shift-invariant per block) and keeps exp args <= 0.
    m = jnp.max(s, axis=-1, keepdims=True)
    p = jnp.exp(s - m)
    seg = jnp.dot(p, ones_seg, preferred_element_type=jnp.float32)                # block sums
    # exact division; off-batch (and fully-padded) blocks are exactly 0 -> guard avoids 0/0.
    # TODO(synk): a fully key-padded row yields zero weights, not PyTorch's NaN propagation.
    p = p / jnp.maximum(seg, 1e-30)

    # --- one PV matmul -> [concat head outputs | head-averaged attn weights] -
    o_ext = jnp.dot(p, v_big, preferred_element_type=jnp.float32)                 # (16, 40)

    # --- out-projection, residual + LayerNorm 1 ------------------------------
    attn_out = jnp.dot(o_ext[:, 0:E], wo_t, preferred_element_type=jnp.float32) + bo
    x = stacked[0:BLQ, :]
    x1 = _layernorm(x + attn_out, g1, be1)

    # --- feed-forward, residual + LayerNorm 2 --------------------------------
    hid = jnp.maximum(jnp.dot(x1, w1_t, preferred_element_type=jnp.float32) + b1, 0.0)
    ff = jnp.dot(hid, w2_t, preferred_element_type=jnp.float32) + b2
    y = _layernorm(x1 + ff, g2, be2)

    # single packed, lane-contiguous store: [block output | attention weights]
    out_ref[...] = jnp.concatenate([y, o_ext[:, E:EV]], axis=-1)                  # (16, 40)


# ---------------------------------------------------------------------------
# One-time parameter packing (hoisted out of the per-call path)
# ---------------------------------------------------------------------------
def prepare_params(params):
    scale = 1.0 / math.sqrt(DH)
    wq_t = params["wqkv"][0:E].T * scale
    wk_t = params["wqkv"][E:2 * E].T
    wv_t = params["wqkv"][2 * E:3 * E].T
    wqkv_ext_t = jnp.concatenate(
        [wq_t, wk_t, wv_t, jnp.zeros((E, LK), jnp.float32)], axis=1)              # (32, 104)
    b_in = jnp.concatenate(
        [params["bqkv"][:, 0:E] * scale, params["bqkv"][:, E:2 * E],
         params["bqkv"][:, 2 * E:], jnp.ones((1, LK), jnp.float32)], axis=1)      # (1, 104)

    slab = jnp.zeros((SLAB_R, SLAB_W), jnp.float32)
    slab = slab.at[R_WQKV:R_WQKV + E, :].set(wqkv_ext_t)
    slab = slab.at[R_WO:R_WO + E, 0:E].set(params["wo"].T)
    slab = slab.at[R_W1:R_W1 + E, 0:FF].set(params["w1"].T)
    slab = slab.at[R_W2:R_W2 + FF, 0:E].set(params["w2"].T)
    slab = slab.at[R_VMASK:R_VMASK + HBL, 0:EV].set(jnp.asarray(_vmask_np))
    slab = slab.at[R_SEG:R_SEG + HBL, 0:HBL].set(jnp.asarray(_ones_seg_np))
    slab = slab.at[R_VEC + V_BIN, :].set(b_in[0])
    slab = slab.at[R_VEC + V_BO, 0:E].set(params["bo"][0])
    slab = slab.at[R_VEC + V_G1, 0:E].set(params["g1"][0])
    slab = slab.at[R_VEC + V_BE1, 0:E].set(params["be1"][0])
    slab = slab.at[R_VEC + V_B1, 0:FF].set(params["b1"][0])
    slab = slab.at[R_VEC + V_B2, 0:E].set(params["b2"][0])
    slab = slab.at[R_VEC + V_G2, 0:E].set(params["g2"][0])
    slab = slab.at[R_VEC + V_BE2, 0:E].set(params["be2"][0])
    return slab


# ---------------------------------------------------------------------------
# Jitted per-call wrapper (only builds the small data slab, then one pallas_call)
# ---------------------------------------------------------------------------
@jax.jit
def cross_attention_block(nodes, questions, key_padding_mask, wts):
    """nodes (B,LQ,E) f32, questions (B,LK,E) f32, key_padding_mask (B,LK) bool, wts = prepare_params(...)"""
    x2 = nodes.reshape(BLQ, E)
    kv2 = questions.reshape(BLK, E)
    addm = key_padding_mask.astype(jnp.float32) * NEG_INF                        # (B, LK)
    big_mask = OFFBATCH + jnp.tile(addm.reshape(1, BLK), (1, H))                 # (16, 64)
    xq = jnp.pad(jnp.concatenate([x2, kv2], axis=0), ((0, 0), (0, DATA_W - E)))  # (32, 64)
    data = jnp.concatenate([xq, big_mask], axis=0)                               # (48, 64)

    def full(shape):
        return pl.BlockSpec(shape, lambda i: (0,) * len(shape))

    packed = pl.pallas_call(
        cross_attn_kernel,
        out_shape=jax.ShapeDtypeStruct((BLQ, EV), jnp.float32),
        grid_spec=pltpu.PrefetchScalarGridSpec(
            num_scalar_prefetch=0,
            # single step: ~40 KB working set; per-step overhead would dominate otherwise.
            # TODO(synk): at production sizes expose a batch-parallel leading grid axis
            # (dimension_semantics=("parallel", ...)) so v7x's two TensorCores share work.
            grid=(1,),
            in_specs=[full((DATA_R, DATA_W)), full((SLAB_R, SLAB_W))],
            out_specs=full((BLQ, EV)),
        ),
        compiler_params=pltpu.CompilerParams(dimension_semantics=("arbitrary",)),
    )(data, wts)

    out = packed[:, 0:E].reshape(B, LQ, E)
    attn_w = packed[:, E:EV].reshape(B, LQ, LK)
    return out, attn_w


# ---------------------------------------------------------------------------
# Pure-JAX reference (mirrors PyTorch eval-mode semantics)
# ---------------------------------------------------------------------------
def reference(nodes, questions, key_padding_mask, p):
    def ln(x, g, b):
        mu = x.mean(-1, keepdims=True)
        var = ((x - mu) ** 2).mean(-1, keepdims=True)
        return (x - mu) / jnp.sqrt(var + EPS) * g + b

    q = nodes @ p["wqkv"][:E].T + p["bqkv"][0, :E]
    k = questions @ p["wqkv"][E:2 * E].T + p["bqkv"][0, E:2 * E]
    v = questions @ p["wqkv"][2 * E:].T + p["bqkv"][0, 2 * E:]

    q = q.reshape(B, LQ, H, DH).transpose(0, 2, 1, 3) / math.sqrt(DH)
    k = k.reshape(B, LK, H, DH).transpose(0, 2, 1, 3)
    v = v.reshape(B, LK, H, DH).transpose(0, 2, 1, 3)

    s = jnp.einsum("bhqd,bhkd->bhqk", q, k)
    s = s + (key_padding_mask.astype(jnp.float32) * NEG_INF)[:, None, None, :]
    w = jax.nn.softmax(s, axis=-1)
    o = jnp.einsum("bhqk,bhkd->bhqd", w, v).transpose(0, 2, 1, 3).reshape(B, LQ, E)
    attn_out = o @ p["wo"].T + p["bo"][0]
    attn_w = w.mean(axis=1)

    x1 = ln(nodes + attn_out, p["g1"][0], p["be1"][0])
    ff = jnp.maximum(x1 @ p["w1"].T + p["b1"][0], 0.0) @ p["w2"].T + p["b2"][0]
    y = ln(x1 + ff, p["g2"][0], p["be2"][0])
    return y, attn_w


# ---------------------------------------------------------------------------
if __name__ == "__main__":
    key = jax.random.PRNGKey(0)
    ks = jax.random.split(key, 12)

    params = {
        "wqkv": 0.05 * jax.random.normal(ks[0], (3 * E, E), jnp.float32),
        "bqkv": 0.01 * jax.random.normal(ks[1], (1, 3 * E), jnp.float32),
        "wo":   0.05 * jax.random.normal(ks[2], (E, E), jnp.float32),
        "bo":   0.01 * jax.random.normal(ks[3], (1, E), jnp.float32),
        "g1":   jnp.ones((1, E), jnp.float32),
        "be1":  jnp.zeros((1, E), jnp.float32),
        "w1":   0.05 * jax.random.normal(ks[4], (FF, E), jnp.float32),
        "b1":   0.01 * jax.random.normal(ks[5], (1, FF), jnp.float32),
        "w2":   0.05 * jax.random.normal(ks[6], (E, FF), jnp.float32),
        "b2":   0.01 * jax.random.normal(ks[7], (1, E), jnp.float32),
        "g2":   jnp.ones((1, E), jnp.float32),
        "be2":  jnp.zeros((1, E), jnp.float32),
    }
    wts = prepare_params(params)          # one-time packing, outside the per-call path

    nodes = jax.random.normal(ks[8], (B, LQ, E), jnp.float32)
    questions = jax.random.normal(ks[9], (B, LK, E), jnp.float32)
    # key_padding_mask: True = ignore that key (PyTorch convention); pad last 2 keys of batch 1.
    key_padding_mask = jnp.zeros((B, LK), jnp.bool_).at[1, LK - 2:].set(True)

    out, attn_w = cross_attention_block(nodes, questions, key_padding_mask, wts)
    jax.block_until_ready((out, attn_w))

    ref_out, ref_w = reference(nodes, questions, key_padding_mask, params)
    assert jnp.allclose(out, ref_out, atol=1e-4, rtol=1e-4), "output mismatch"
    assert jnp.allclose(attn_w, ref_w, atol=1e-4, rtol=1e-4), "attn weight mismatch"

    print("KERNEL_OK")
</pallas_src>

<mosaic_0001>
module attributes {stable_mosaic.version = 11 : i64} {
  func.func @cross_attn_kernel(%arg0: i32, %arg1: memref<48x64xf32, #tpu.memory_space<vmem>>, %arg2: memref<296x104xf32, #tpu.memory_space<vmem>>, %arg3: memref<16x40xf32, #tpu.memory_space<vmem>>) attributes {dimension_semantics = [#tpu.dimension_semantics<arbitrary>], iteration_bounds = array<i64: 1>, scalar_prefetch = 0 : i64, scratch_operands = 0 : i64, tpu.core_type = #tpu.core_type<tc>, window_params = [{pipeline_mode = #tpu.pipeline_mode<synchronous>, transform_indices = @transform_0, window_bounds = array<i64: 48, 64>}, {pipeline_mode = #tpu.pipeline_mode<synchronous>, transform_indices = @transform_1, window_bounds = array<i64: 296, 104>}, {pipeline_mode = #tpu.pipeline_mode<synchronous>, transform_indices = @transform_2, window_bounds = array<i64: 16, 40>}]} {
    %c0 = arith.constant 0 : index
    %c0_0 = arith.constant 0 : index
    %0 = vector.load %arg1[%c0, %c0_0] : memref<48x64xf32, #tpu.memory_space<vmem>>, vector<32x32xf32>
    %c32 = arith.constant 32 : index
    %c0_1 = arith.constant 0 : index
    %1 = vector.load %arg1[%c32, %c0_1] : memref<48x64xf32, #tpu.memory_space<vmem>>, vector<16x64xf32>
    %c0_2 = arith.constant 0 : index
    %c0_3 = arith.constant 0 : index
    %2 = vector.load %arg2[%c0_2, %c0_3] : memref<296x104xf32, #tpu.memory_space<vmem>>, vector<32x104xf32>
    %c32_4 = arith.constant 32 : index
    %c0_5 = arith.constant 0 : index
    %3 = vector.load %arg2[%c32_4, %c0_5] : memref<296x104xf32, #tpu.memory_space<vmem>>, vector<32x32xf32>
    %c64 = arith.constant 64 : index
    %c0_6 = arith.constant 0 : index
    %4 = vector.load %arg2[%c64, %c0_6] : memref<296x104xf32, #tpu.memory_space<vmem>>, vector<32x64xf32>
    %c96 = arith.constant 96 : index
    %c0_7 = arith.constant 0 : index
    %5 = vector.load %arg2[%c96, %c0_7] : memref<296x104xf32, #tpu.memory_space<vmem>>, vector<64x32xf32>
    %c160 = arith.constant 160 : index
    %c0_8 = arith.constant 0 : index
    %6 = vector.load %arg2[%c160, %c0_8] : memref<296x104xf32, #tpu.memory_space<vmem>>, vector<64x40xf32>
    %c224 = arith.constant 224 : index
    %c0_9 = arith.constant 0 : index
    %7 = vector.load %arg2[%c224, %c0_9] : memref<296x104xf32, #tpu.memory_space<vmem>>, vector<64x64xf32>
    %c288 = arith.constant 288 : index
    %c0_10 = arith.constant 0 : index
    %8 = vector.load %arg2[%c288, %c0_10] : memref<296x104xf32, #tpu.memory_space<vmem>>, vector<8x104xf32>
    %9 = vector.extract_strided_slice %8 {offsets = [0, 0], sizes = [1, 104], strides = [1, 1]} : vector<8x104xf32> to vector<1x104xf32>
    %10 = vector.extract_strided_slice %8 {offsets = [1, 0], sizes = [1, 32], strides = [1, 1]} : vector<8x104xf32> to vector<1x32xf32>
    %11 = vector.extract_strided_slice %8 {offsets = [2, 0], sizes = [1, 32], strides = [1, 1]} : vector<8x104xf32> to vector<1x32xf32>
    %12 = vector.extract_strided_slice %8 {offsets = [3, 0], sizes = [1, 32], strides = [1, 1]} : vector<8x104xf32> to vector<1x32xf32>
    %13 = vector.extract_strided_slice %8 {offsets = [4, 0], sizes = [1, 64], strides = [1, 1]} : vector<8x104xf32> to vector<1x64xf32>
    %14 = vector.extract_strided_slice %8 {offsets = [5, 0], sizes = [1, 32], strides = [1, 1]} : vector<8x104xf32> to vector<1x32xf32>
    %15 = vector.extract_strided_slice %8 {offsets = [6, 0], sizes = [1, 32], strides = [1, 1]} : vector<8x104xf32> to vector<1x32xf32>
    %16 = vector.extract_strided_slice %8 {offsets = [7, 0], sizes = [1, 32], strides = [1, 1]} : vector<8x104xf32> to vector<1x32xf32>
    %cst = arith.constant dense<0.000000e+00> : vector<32x104xf32>
    %17 = tpu.matmul %0, %2, %cst {dimension_numbers = #tpu.dot_dimension_numbers<[1], [0], [0], [1], [0, 0, 1, 1], [], []>} : vector<32x32xf32>, vector<32x104xf32>, vector<32x104xf32> -> vector<32x104xf32>
    %18 = vector.broadcast %9 : vector<1x104xf32> to vector<32x104xf32>
    %19 = arith.addf %17, %18 : vector<32x104xf32>
    %20 = vector.extract_strided_slice %19 {offsets = [0, 0], sizes = [16, 32], strides = [1, 1]} : vector<32x104xf32> to vector<16x32xf32>
    %21 = vector.extract_strided_slice %19 {offsets = [16, 32], sizes = [16, 32], strides = [1, 1]} : vector<32x104xf32> to vector<16x32xf32>
    %22 = vector.extract_strided_slice %19 {offsets = [16, 64], sizes = [16, 40], strides = [1, 1]} : vector<32x104xf32> to vector<16x40xf32>
    %23 = tpu.concatenate %21, %21, %21, %21 in 0 : vector<16x32xf32>, vector<16x32xf32>, vector<16x32xf32>, vector<16x32xf32> -> vector<64x32xf32>
    %24 = vector.extract_strided_slice %6 {offsets = [0, 0], sizes = [64, 32], strides = [1, 1]} : vector<64x40xf32> to vector<64x32xf32>
    %25 = arith.mulf %23, %24 : vector<64x32xf32>
    %26 = tpu.concatenate %22, %22, %22, %22 in 0 : vector<16x40xf32>, vector<16x40xf32>, vector<16x40xf32>, vector<16x40xf32> -> vector<64x40xf32>
    %27 = arith.mulf %26, %6 : vector<64x40xf32>
    %cst_11 = arith.constant dense<0.000000e+00> : vector<16x64xf32>
    %28 = tpu.matmul %20, %25, %cst_11 {dimension_numbers = #tpu.dot_dimension_numbers<[1], [1], [0], [0], [0, 0, 1, 0], [], []>} : vector<16x32xf32>, vector<64x32xf32>, vector<16x64xf32> -> vector<16x64xf32>
    %29 = arith.addf %28, %1 : vector<16x64xf32>
    %cst_12 = arith.constant dense<0xFF800000> : vector<16xf32>
    %30 = vector.multi_reduction <maximumf>, %29, %cst_12 [1] : vector<16x64xf32> to vector<16xf32>
    %31 = vector.shape_cast %30 : vector<16xf32> to vector<16x1xf32>
    %32 = vector.broadcast %31 : vector<16x1xf32> to vector<16x64xf32>
    %33 = arith.subf %29, %32 : vector<16x64xf32>
    %34 = math.exp %33 : vector<16x64xf32>
    %cst_13 = arith.constant dense<0.000000e+00> : vector<16x64xf32>
    %35 = tpu.matmul %34, %7, %cst_13 {dimension_numbers = #tpu.dot_dimension_numbers<[1], [0], [0], [1], [0, 0, 1, 1], [], []>} : vector<16x64xf32>, vector<64x64xf32>, vector<16x64xf32> -> vector<16x64xf32>
    %cst_14 = arith.constant 1.000000e-30 : f32
    %36 = vector.broadcast %cst_14 : f32 to vector<16x64xf32>
    %37 = arith.maximumf %35, %36 : vector<16x64xf32>
    %38 = arith.divf %34, %37 : vector<16x64xf32>
    %cst_15 = arith.constant dense<0.000000e+00> : vector<16x40xf32>
    %39 = tpu.matmul %38, %27, %cst_15 {dimension_numbers = #tpu.dot_dimension_numbers<[1], [0], [0], [1], [0, 0, 1, 1], [], []>} : vector<16x64xf32>, vector<64x40xf32>, vector<16x40xf32> -> vector<16x40xf32>
    %40 = vector.extract_strided_slice %39 {offsets = [0, 0], sizes = [16, 32], strides = [1, 1]} : vector<16x40xf32> to vector<16x32xf32>
    %cst_16 = arith.constant dense<0.000000e+00> : vector<16x32xf32>
    %41 = tpu.matmul %40, %3, %cst_16 {dimension_numbers = #tpu.dot_dimension_numbers<[1], [0], [0], [1], [0, 0, 1, 1], [], []>} : vector<16x32xf32>, vector<32x32xf32>, vector<16x32xf32> -> vector<16x32xf32>
    %42 = vector.broadcast %10 : vector<1x32xf32> to vector<16x32xf32>
    %43 = arith.addf %41, %42 : vector<16x32xf32>
    %44 = vector.extract_strided_slice %0 {offsets = [0, 0], sizes = [16, 32], strides = [1, 1]} : vector<32x32xf32> to vector<16x32xf32>
    %45 = arith.addf %44, %43 : vector<16x32xf32>
    %cst_17 = arith.constant dense<0.000000e+00> : vector<16xf32>
    %46 = vector.multi_reduction <add>, %45, %cst_17 [1] : vector<16x32xf32> to vector<16xf32>
    %47 = vector.shape_cast %46 : vector<16xf32> to vector<16x1xf32>
    %cst_18 = arith.constant 3.200000e+01 : f32
    %48 = vector.broadcast %cst_18 : f32 to vector<16x1xf32>
    %49 = arith.divf %47, %48 : vector<16x1xf32>
    %50 = vector.broadcast %49 : vector<16x1xf32> to vector<16x32xf32>
    %51 = arith.subf %45, %50 : vector<16x32xf32>
    %52 = arith.mulf %51, %51 : vector<16x32xf32>
    %cst_19 = arith.constant dense<0.000000e+00> : vector<16xf32>
    %53 = vector.multi_reduction <add>, %52, %cst_19 [1] : vector<16x32xf32> to vector<16xf32>
    %54 = vector.shape_cast %53 : vector<16xf32> to vector<16x1xf32>
    %cst_20 = arith.constant 3.200000e+01 : f32
    %55 = vector.broadcast %cst_20 : f32 to vector<16x1xf32>
    %56 = arith.divf %54, %55 : vector<16x1xf32>
    %57 = vector.broadcast %49 : vector<16x1xf32> to vector<16x32xf32>
    %58 = arith.subf %45, %57 : vector<16x32xf32>
    %cst_21 = arith.constant 9.99999974E-6 : f32
    %59 = vector.broadcast %cst_21 : f32 to vector<16x1xf32>
    %60 = arith.addf %56, %59 : vector<16x1xf32>
    %61 = math.rsqrt %60 : vector<16x1xf32>
    %62 = vector.broadcast %61 : vector<16x1xf32> to vector<16x32xf32>
    %63 = arith.mulf %58, %62 : vector<16x32xf32>
    %64 = vector.broadcast %11 : vector<1x32xf32> to vector<16x32xf32>
    %65 = arith.mulf %63, %64 : vector<16x32xf32>
    %66 = vector.broadcast %12 : vector<1x32xf32> to vector<16x32xf32>
    %67 = arith.addf %65, %66 : vector<16x32xf32>
    %cst_22 = arith.constant dense<0.000000e+00> : vector<16x64xf32>
    %68 = tpu.matmul %67, %4, %cst_22 {dimension_numbers = #tpu.dot_dimension_numbers<[1], [0], [0], [1], [0, 0, 1, 1], [], []>} : vector<16x32xf32>, vector<32x64xf32>, vector<16x64xf32> -> vector<16x64xf32>
    %69 = vector.broadcast %13 : vector<1x64xf32> to vector<16x64xf32>
    %70 = arith.addf %68, %69 : vector<16x64xf32>
    %cst_23 = arith.constant 0.000000e+00 : f32
    %71 = vector.broadcast %cst_23 : f32 to vector<16x64xf32>
    %72 = arith.maximumf %70, %71 : vector<16x64xf32>
    %cst_24 = arith.constant dense<0.000000e+00> : vector<16x32xf32>
    %73 = tpu.matmul %72, %5, %cst_24 {dimension_numbers = #tpu.dot_dimension_numbers<[1], [0], [0], [1], [0, 0, 1, 1], [], []>} : vector<16x64xf32>, vector<64x32xf32>, vector<16x32xf32> -> vector<16x32xf32>
    %74 = vector.broadcast %14 : vector<1x32xf32> to vector<16x32xf32>
    %75 = arith.addf %73, %74 : vector<16x32xf32>
    %76 = arith.addf %67, %75 : vector<16x32xf32>
    %cst_25 = arith.constant dense<0.000000e+00> : vector<16xf32>
    %77 = vector.multi_reduction <add>, %76, %cst_25 [1] : vector<16x32xf32> to vector<16xf32>
    %78 = vector.shape_cast %77 : vector<16xf32> to vector<16x1xf32>
    %cst_26 = arith.constant 3.200000e+01 : f32
    %79 = vector.broadcast %cst_26 : f32 to vector<16x1xf32>
    %80 = arith.divf %78, %79 : vector<16x1xf32>
    %81 = vector.broadcast %80 : vector<16x1xf32> to vector<16x32xf32>
    %82 = arith.subf %76, %81 : vector<16x32xf32>
    %83 = arith.mulf %82, %82 : vector<16x32xf32>
    %cst_27 = arith.constant dense<0.000000e+00> : vector<16xf32>
    %84 = vector.multi_reduction <add>, %83, %cst_27 [1] : vector<16x32xf32> to vector<16xf32>
    %85 = vector.shape_cast %84 : vector<16xf32> to vector<16x1xf32>
    %cst_28 = arith.constant 3.200000e+01 : f32
    %86 = vector.broadcast %cst_28 : f32 to vector<16x1xf32>
    %87 = arith.divf %85, %86 : vector<16x1xf32>
    %88 = vector.broadcast %80 : vector<16x1xf32> to vector<16x32xf32>
    %89 = arith.subf %76, %88 : vector<16x32xf32>
    %cst_29 = arith.constant 9.99999974E-6 : f32
    %90 = vector.broadcast %cst_29 : f32 to vector<16x1xf32>
    %91 = arith.addf %87, %90 : vector<16x1xf32>
    %92 = math.rsqrt %91 : vector<16x1xf32>
    %93 = vector.broadcast %92 : vector<16x1xf32> to vector<16x32xf32>
    %94 = arith.mulf %89, %93 : vector<16x32xf32>
    %95 = vector.broadcast %15 : vector<1x32xf32> to vector<16x32xf32>
    %96 = arith.mulf %94, %95 : vector<16x32xf32>
    %97 = vector.broadcast %16 : vector<1x32xf32> to vector<16x32xf32>
    %98 = arith.addf %96, %97 : vector<16x32xf32>
    %99 = vector.extract_strided_slice %39 {offsets = [0, 32], sizes = [16, 8], strides = [1, 1]} : vector<16x40xf32> to vector<16x8xf32>
    %100 = tpu.concatenate %98, %99 in 1 : vector<16x32xf32>, vector<16x8xf32> -> vector<16x40xf32>
    %c0_30 = arith.constant 0 : index
    %c0_31 = arith.constant 0 : index
    %101 = vector.load %arg3[%c0_30, %c0_31] : memref<16x40xf32, #tpu.memory_space<vmem>>, vector<16x40xf32>
    tpu.vector_store %arg3[%c0_30, %c0_31], %100 {strides = array<i32>} : memref<16x40xf32, #tpu.memory_space<vmem>>, vector<16x40xf32>,
    return
  }
  func.func @transform_0(%arg0: i32) -> (i32, i32) {
    %c0_i32 = arith.constant 0 : i32
    %c0_i32_0 = arith.constant 0 : i32
    %c0_i32_1 = arith.constant 0 : i32
    return %c0_i32, %c0_i32_0 : i32, i32
  }
  func.func @transform_1(%arg0: i32) -> (i32, i32) {
    %c0_i32 = arith.constant 0 : i32
    %c0_i32_0 = arith.constant 0 : i32
    %c0_i32_1 = arith.constant 0 : i32
    return %c0_i32, %c0_i32_0 : i32, i32
  }
  func.func @transform_2(%arg0: i32) -> (i32, i32) {
    %c0_i32 = arith.constant 0 : i32
    %c0_i32_0 = arith.constant 0 : i32
    %c0_i32_1 = arith.constant 0 : i32
    return %c0_i32, %c0_i32_0 : i32, i32
  }
}

</mosaic_0001>

<llo_original>
// kernel: cross_attention_block.1
$region0: #{cross_attention_block.1}
  #allocation0 [shape = 'u32[]', space=smem, size = 0x4, offset = 0x4, fixed_abs, tag = 'smem constant byte address 0x4 - core index']
  #allocation1 [shape = 'u32[72,128]{1,0:T(1,128)}', space=vmem, size = 0x9000, scoped, tag = 'internal scratch']
  %s0 = inlined_call_operand.vmem [shape: f32[48,64], index: 0, kind: input, shape index: {}]
  %s1 = inlined_call_operand.hbm [shape: f32[296,104], index: 1, kind: input, shape index: {}]
  %s2 = inlined_call_operand.vmem [shape: f32[16,40], index: 2, kind: output, shape index: {}]
  %s3 = sld [smem:[#allocation0]]
  $region22: #{cross_attention_block.1} parent=0
    _
  %s5 = ssub.s32 1, %s3
  %s6 = scalar_select 0, %s5, %s3
  $region1: #{cross_attention_block.1} parent=0
    #allocation2 [shape = 'u8[151552]{0}', space=vmem, size = 0x25000, scoped, tag = 'input window, operand 1, single buffered']
    #allocation3 [shape = 's32[1]{0}', space=sflag, size = 0x4, scoped, tag = 'scoped memory for cross_attention_block.1']
    %7 = vsyncpa [#allocation3], 0
    // Predicated region
    $region2: #{cross_attention_block.1} parent=1 // pred_check
      _
    $region3: #{cross_attention_block.1} parent=1 // pred_check_branch
      %9 = sbr.rel (0) target = $region5
    $region4: #{cross_attention_block.1} parent=1 // pred_region
      _
    $region5: #{cross_attention_block.1} parent=1 // pred_fallthru
      _
    // Predicated region
    $region6: #{cross_attention_block.1} parent=1 // pred_check
      _
    $region7: #{cross_attention_block.1} parent=1 // pred_check_branch
      %11 = sbr.rel (0) target = $region9
    $region8: #{cross_attention_block.1} parent=1 // pred_region
      %13 = vsyncadd [#allocation3], 0
      %s14 = sshll.u32 %s1, 4
      %s15 = int_to_ptr.hbm [resolvable:$true] %s14
      %s16 = sshll.u32 [#allocation2], 4
      %s17 = int_to_ptr.vmem [resolvable:$true] %s16
      %22 = dma.hbm_to_vmem [thread:$0]  %s15, 4736, %s17, [#allocation3], 128, 128, 8
    $region9: #{cross_attention_block.1} parent=1 // pred_fallthru
      _
    // Predicated region
    $region10: #{cross_attention_block.1} parent=1 // pred_check
      _
    $region11: #{cross_attention_block.1} parent=1 // pred_check_branch
      %24 = sbr.rel (0) target = $region13
    $region12: #{cross_attention_block.1} parent=1 // pred_region
      %26 = dma.done [#allocation3], 4736
    $region13: #{cross_attention_block.1} parent=1 // pred_fallthru
      _
    %v27 = vld [vmem:[%s0] sm:$0xff]
    %v28 = vld [vmem:[%s0 + $0x8] sm:$0xff]
    %v29 = vld [vmem:[%s0 + $0x10] sm:$0xff]
    %v30 = vld [vmem:[%s0 + $0x18] sm:$0xff]
    %v31 = vld [vmem:[%s0 + $0x20] sm:$0xff]
    %v32 = vld [vmem:[%s0 + $0x28] sm:$0xff]
    %v33 = vld [vmem:[#allocation2] sm:$0xff]
    %v34 = vld [vmem:[#allocation2 + $0x8] sm:$0xff]
    %v35 = vld [vmem:[#allocation2 + $0x10] sm:$0xff]
    %v36 = vld [vmem:[#allocation2 + $0x18] sm:$0xff]
    %v37 = vld [vmem:[#allocation2 + $0x20] sm:$0xff]
    %v38 = vld [vmem:[#allocation2 + $0x28] sm:$0xff]
    %v39 = vld [vmem:[#allocation2 + $0x30] sm:$0xff]
    %v40 = vld [vmem:[#allocation2 + $0x38] sm:$0xff]
    %v41 = vld [vmem:[#allocation2 + $0x40] sm:$0xff]
    %v42 = vld [vmem:[#allocation2 + $0x48] sm:$0xff]
    %v43 = vld [vmem:[#allocation2 + $0x50] sm:$0xff]
    %v44 = vld [vmem:[#allocation2 + $0x58] sm:$0xff]
    %v45 = vld [vmem:[#allocation2 + $0x60] sm:$0xff]
    %v46 = vld [vmem:[#allocation2 + $0x68] sm:$0xff]
    %v47 = vld [vmem:[#allocation2 + $0x70] sm:$0xff]
    %v48 = vld [vmem:[#allocation2 + $0x78] sm:$0xff]
    %v49 = vld [vmem:[#allocation2 + $0x80] sm:$0xff]
    %v50 = vld [vmem:[#allocation2 + $0x88] sm:$0xff]
    %v51 = vld [vmem:[#allocation2 + $0x90] sm:$0xff]
    %v52 = vld [vmem:[#allocation2 + $0x98] sm:$0xff]
    %v53 = vld [vmem:[#allocation2 + $0xa0] sm:$0xff]
    %v54 = vld [vmem:[#allocation2 + $0xa8] sm:$0xff]
    %v55 = vld [vmem:[#allocation2 + $0xb0] sm:$0xff]
    %v56 = vld [vmem:[#allocation2 + $0xb8] sm:$0xff]
    %v57 = vld [vmem:[#allocation2 + $0xc0] sm:$0xff]
    %v58 = vld [vmem:[#allocation2 + $0xc8] sm:$0xff]
    %v59 = vld [vmem:[#allocation2 + $0xd0] sm:$0xff]
    %v60 = vld [vmem:[#allocation2 + $0xd8] sm:$0xff]
    %v61 = vld [vmem:[#allocation2 + $0xe0] sm:$0xff]
    %v62 = vld [vmem:[#allocation2 + $0xe8] sm:$0xff]
    %v63 = vld [vmem:[#allocation2 + $0xf0] sm:$0xff]
    %v64 = vld [vmem:[#allocation2 + $0xf8] sm:$0xff]
    %v65 = vld [vmem:[#allocation2 + $0x100] sm:$0xff]
    %v66 = vld [vmem:[#allocation2 + $0x108] sm:$0xff]
    %v67 = vld [vmem:[#allocation2 + $0x110] sm:$0xff]
    %v68 = vld [vmem:[#allocation2 + $0x118] sm:$0xff]
    %v69 = vld [vmem:[#allocation2 + $0x120] sm:$0xff]
    %v70 = vperm.slane %v69, 0
    %vm71 = vcmask 261120
    %v73 = vsel %vm71, %v27, 0
    %v76 = vsel %vm71, %v28, 0
    %v79 = vsel %vm71, %v29, 0
    %v82 = vsel %vm71, %v30, 0
    %84 = vmatpush.msra.mxu0 0.0
    %85 = vmatpush.msra.mxu0 0.0
    %86 = vmatpush.msra.mxu0 0.0
    %87 = vmatpush.msra.mxu0 0.0
    %88 = vmatpush.msra.mxu0 0.0
    %89 = vmatpush.msra.mxu0 0.0
    %90 = vmatpush.msra.mxu0 0.0
    %91 = vmatpush.msra.mxu0 0.0
    %92 = vmatpush.msra.mxu0 0.0
    %93 = vmatpush.msra.mxu0 0.0
    %94 = vmatpush.msra.mxu0 0.0
    %95 = vmatpush.msra.mxu0 0.0
    %96 = vmatpush.msra.mxu0 %v36
    %97 = vmatpush.msra.mxu0 %v35
    %98 = vmatpush.msra.mxu0 %v34
    %99 = vmatpush.msra.mxu0 %v33
    %100 = vmatmul.f32.gmra.mxu0 %v73
    %v101 = vpop.f32.mrf.mxu0
    %v102 = vadd.f32 %v70, %v101
    %103 = vmatmul.f32.gmra.mxu0 %v76
    %v104 = vpop.f32.mrf.mxu0
    %v105 = vadd.f32 %v70, %v104
    %106 = vmatmul.f32.gmra.mxu0 %v79
    %v107 = vpop.f32.mrf.mxu0
    %v108 = vadd.f32 %v70, %v107
    %109 = vmatmul.f32.gmra.mxu0 %v82
    %v110 = vpop.f32.mrf.mxu0
    %v111 = vadd.f32 %v70, %v110
    %112 = vdwg.mxu0
    %121 = vrot.lane.b32.xlu0 %v53, 32
    %v122 = vpop.permute.xlu0 %121
    %123 = vrot.lane.b32.xlu0 %v54, 32
    %v124 = vpop.permute.xlu0 %123
    %125 = vrot.lane.b32.xlu0 %v55, 32
    %v126 = vpop.permute.xlu0 %125
    %127 = vrot.lane.b32.xlu0 %v56, 32
    %v128 = vpop.permute.xlu0 %127
    %129 = vrot.lane.b32.xlu0 %v57, 32
    %v130 = vpop.permute.xlu0 %129
    %131 = vrot.lane.b32.xlu0 %v58, 32
    %v132 = vpop.permute.xlu0 %131
    %133 = vrot.lane.b32.xlu0 %v59, 32
    %v134 = vpop.permute.xlu0 %133
    %135 = vrot.lane.b32.xlu0 %v60, 32
    %v136 = vpop.permute.xlu0 %135
    %v145 = vmul.f32 %v108, %v122
    %v146 = vmul.f32 %v111, %v124
    %v147 = vmul.f32 %v108, %v126
    %v148 = vmul.f32 %v111, %v128
    %v149 = vmul.f32 %v108, %v130
    %v150 = vmul.f32 %v111, %v132
    %v151 = vmul.f32 %v108, %v134
    %v152 = vmul.f32 %v111, %v136
    %153 = vrot.lane.b32.xlu0 %v53, 64
    %v154 = vpop.permute.xlu0 %153
    %155 = vrot.lane.b32.xlu0 %v54, 64
    %v156 = vpop.permute.xlu0 %155
    %157 = vrot.lane.b32.xlu0 %v55, 64
    %v158 = vpop.permute.xlu0 %157
    %159 = vrot.lane.b32.xlu0 %v56, 64
    %v160 = vpop.permute.xlu0 %159
    %161 = vrot.lane.b32.xlu0 %v57, 64
    %v162 = vpop.permute.xlu0 %161
    %163 = vrot.lane.b32.xlu0 %v58, 64
    %v164 = vpop.permute.xlu0 %163
    %165 = vrot.lane.b32.xlu0 %v59, 64
    %v166 = vpop.permute.xlu0 %165
    %167 = vrot.lane.b32.xlu0 %v60, 64
    %v168 = vpop.permute.xlu0 %167
    %v177 = vmul.f32 %v108, %v154
    %v178 = vmul.f32 %v111, %v156
    %v179 = vmul.f32 %v108, %v158
    %v180 = vmul.f32 %v111, %v160
    %v181 = vmul.f32 %v108, %v162
    %v182 = vmul.f32 %v111, %v164
    %v183 = vmul.f32 %v108, %v166
    %v184 = vmul.f32 %v111, %v168
    %193 = vrot.lane.b32.xlu0 %v145, 96
    %v194 = vpop.permute.xlu0 %193
    %195 = vrot.lane.b32.xlu0 %v146, 96
    %v196 = vpop.permute.xlu0 %195
    %197 = vrot.lane.b32.xlu0 %v147, 96
    %v198 = vpop.permute.xlu0 %197
    %199 = vrot.lane.b32.xlu0 %v148, 96
    %v200 = vpop.permute.xlu0 %199
    %201 = vrot.lane.b32.xlu0 %v149, 96
    %v202 = vpop.permute.xlu0 %201
    %203 = vrot.lane.b32.xlu0 %v150, 96
    %v204 = vpop.permute.xlu0 %203
    %205 = vrot.lane.b32.xlu0 %v151, 96
    %v206 = vpop.permute.xlu0 %205
    %207 = vrot.lane.b32.xlu0 %v152, 96
    %v208 = vpop.permute.xlu0 %207
    %v210 = vsel %vm71, %v102, 0
    %v213 = vsel %vm71, %v105, 0
    %v215 = vsel %vm71, %v194, 0
    %v217 = vsel %vm71, %v196, 0
    %v219 = vsel %vm71, %v198, 0
    %v221 = vsel %vm71, %v200, 0
    %v223 = vsel %vm71, %v202, 0
    %v225 = vsel %vm71, %v204, 0
    %v227 = vsel %vm71, %v206, 0
    %v229 = vsel %vm71, %v208, 0
    %231 = vmatpush.xpose.msra.mxu0 0.0
    %232 = vmatpush.xpose.msra.mxu0 0.0
    %233 = vmatpush.xpose.msra.mxu0 0.0
    %234 = vmatpush.xpose.msra.mxu0 0.0
    %235 = vmatpush.xpose.msra.mxu0 0.0
    %236 = vmatpush.xpose.msra.mxu0 0.0
    %237 = vmatpush.xpose.msra.mxu0 0.0
    %238 = vmatpush.xpose.msra.mxu0 0.0
    %239 = vmatpush.xpose.msra.mxu0 %v229
    %240 = vmatpush.xpose.msra.mxu0 %v227
    %241 = vmatpush.xpose.msra.mxu0 %v225
    %242 = vmatpush.xpose.msra.mxu0 %v223
    %243 = vmatpush.xpose.msra.mxu0 %v221
    %244 = vmatpush.xpose.msra.mxu0 %v219
    %245 = vmatpush.xpose.msra.mxu0 %v217
    %246 = vmatpush.xpose.msra.mxu0 %v215
    %247 = vmatmul.f32.gmra.mxu0 %v210
    %v248 = vpop.f32.mrf.mxu0
    %v249 = vadd.f32 %v31, %v248
    %250 = vmatmul.f32.gmra.mxu0 %v213
    %v251 = vpop.f32.mrf.mxu0
    %v252 = vadd.f32 %v32, %v251
    %253 = vdwg.mxu0
    %vm254 = vcmask 523264
    %v255 = vsel %vm254, %v249, -inf
    %256 = vmax.xlane.f32.xlu0 %v255
    %v257 = vpop.xlane.xlu0 %256
    %v258 = vsel %vm254, %v252, -inf
    %259 = vmax.xlane.f32.xlu0 %v258
    %v260 = vpop.xlane.xlu0 %259
    %v261 = vsub.f32 %v249, %v257
    %v262 = vsub.f32 %v252, %v260
    %v263 = vmul.f32 %v261, 1.442695
    %v264 = vpow.pop %v263
    %v265 = vmul.f32 %v262, 1.442695
    %v266 = vpow.pop %v265
    %v268 = vsel %vm254, %v264, 0
    %v271 = vsel %vm254, %v266, 0
    %273 = vmatpush.msra.mxu0 0.0
    %274 = vmatpush.msra.mxu0 0.0
    %275 = vmatpush.msra.mxu0 0.0
    %276 = vmatpush.msra.mxu0 0.0
    %277 = vmatpush.msra.mxu0 0.0
    %278 = vmatpush.msra.mxu0 0.0
    %279 = vmatpush.msra.mxu0 0.0
    %280 = vmatpush.msra.mxu0 0.0
    %281 = vmatpush.msra.mxu0 %v68
    %282 = vmatpush.msra.mxu0 %v67
    %283 = vmatpush.msra.mxu0 %v66
    %284 = vmatpush.msra.mxu0 %v65
    %285 = vmatpush.msra.mxu0 %v64
    %286 = vmatpush.msra.mxu0 %v63
    %287 = vmatpush.msra.mxu0 %v62
    %288 = vmatpush.msra.mxu0 %v61
    %289 = vmatmul.f32.gmra.mxu0 %v268
    %v290 = vpop.f32.mrf.mxu0
    %v291 = vadd.f32 0.0, %v290
    %292 = vmatmul.f32.gmra.mxu0 %v271
    %v293 = vpop.f32.mrf.mxu0
    %v294 = vadd.f32 0.0, %v293
    %295 = vdwg.mxu0
    %v296 = vmax.f32 %v291, 1e-30
    %v297 = vmax.f32 %v294, 1e-30
    %v298 = vrcp.pop %v296
    %v299 = vmul.f32 %v296, %v298
    %v300 = vsub.f32 1.0, %v299
    %v301 = vmul.f32 %v298, %v300
    %v302 = vadd.f32 %v298, %v301
    %vm303 = vweird.f32 %v296
    %vm304 = vweird.f32 %v298
    %vm305 = vmor %vm303, %vm304
    %v306 = vsel %vm305, %v298, %v302
    %v307 = vand.u32 2147483647, %v296
    %vm308 = vcmp.eq.f32.partialorder %v307, 8.507059e+37
    %v309 = vand.u32 %v296, 2147483648
    %v310 = vor.u32 1.1754944e-38, %v309
    %v311 = vsel %vm308, %v310, %v306
    %v312 = vmul.f32 %v264, %v311
    %v313 = vrcp.pop %v297
    %v314 = vmul.f32 %v297, %v313
    %v315 = vsub.f32 1.0, %v314
    %v316 = vmul.f32 %v313, %v315
    %v317 = vadd.f32 %v313, %v316
    %vm318 = vweird.f32 %v297
    %vm319 = vweird.f32 %v313
    %vm320 = vmor %vm318, %vm319
    %v321 = vsel %vm320, %v313, %v317
    %v322 = vand.u32 2147483647, %v297
    %vm323 = vcmp.eq.f32.partialorder %v322, 8.507059e+37
    %v324 = vand.u32 %v297, 2147483648
    %v325 = vor.u32 1.1754944e-38, %v324
    %v326 = vsel %vm323, %v325, %v321
    %v327 = vmul.f32 %v266, %v326
    %336 = vrot.lane.b32.xlu0 %v177, 64
    %v337 = vpop.permute.xlu0 %336
    %338 = vrot.lane.b32.xlu0 %v178, 64
    %v339 = vpop.permute.xlu0 %338
    %340 = vrot.lane.b32.xlu0 %v179, 64
    %v341 = vpop.permute.xlu0 %340
    %342 = vrot.lane.b32.xlu0 %v180, 64
    %v343 = vpop.permute.xlu0 %342
    %344 = vrot.lane.b32.xlu0 %v181, 64
    %v345 = vpop.permute.xlu0 %344
    %346 = vrot.lane.b32.xlu0 %v182, 64
    %v347 = vpop.permute.xlu0 %346
    %348 = vrot.lane.b32.xlu0 %v183, 64
    %v349 = vpop.permute.xlu0 %348
    %350 = vrot.lane.b32.xlu0 %v184, 64
    %v351 = vpop.permute.xlu0 %350
    %v361 = vsel %vm254, %v312, 0
    %v364 = vsel %vm254, %v327, 0
    %366 = vmatpush.msra.mxu0 0.0
    %367 = vmatpush.msra.mxu0 0.0
    %368 = vmatpush.msra.mxu0 0.0
    %369 = vmatpush.msra.mxu0 0.0
    %370 = vmatpush.msra.mxu0 0.0
    %371 = vmatpush.msra.mxu0 0.0
    %372 = vmatpush.msra.mxu0 0.0
    %373 = vmatpush.msra.mxu0 0.0
    %374 = vmatpush.msra.mxu0 %v351
    %375 = vmatpush.msra.mxu0 %v349
    %376 = vmatpush.msra.mxu0 %v347
    %377 = vmatpush.msra.mxu0 %v345
    %378 = vmatpush.msra.mxu0 %v343
    %379 = vmatpush.msra.mxu0 %v341
    %380 = vmatpush.msra.mxu0 %v339
    %381 = vmatpush.msra.mxu0 %v337
    %382 = vmatmul.f32.gmra.mxu0 %v361
    %v383 = vpop.f32.mrf.mxu0
    %v384 = vadd.f32 0.0, %v383
    %385 = vmatmul.f32.gmra.mxu0 %v364
    %v386 = vpop.f32.mrf.mxu0
    %v387 = vadd.f32 0.0, %v386
    %388 = vdwg.mxu0
    %v389 = vperm.slane %v69, 1
    %v391 = vsel %vm71, %v384, 0
    %v394 = vsel %vm71, %v387, 0
    %396 = vmatpush.msra.mxu0 0.0
    %397 = vmatpush.msra.mxu0 0.0
    %398 = vmatpush.msra.mxu0 0.0
    %399 = vmatpush.msra.mxu0 0.0
    %400 = vmatpush.msra.mxu0 0.0
    %401 = vmatpush.msra.mxu0 0.0
    %402 = vmatpush.msra.mxu0 0.0
    %403 = vmatpush.msra.mxu0 0.0
    %404 = vmatpush.msra.mxu0 0.0
    %405 = vmatpush.msra.mxu0 0.0
    %406 = vmatpush.msra.mxu0 0.0
    %407 = vmatpush.msra.mxu0 0.0
    %408 = vmatpush.msra.mxu0 %v40
    %409 = vmatpush.msra.mxu0 %v39
    %410 = vmatpush.msra.mxu0 %v38
    %411 = vmatpush.msra.mxu0 %v37
    %412 = vmatmul.f32.gmra.mxu0 %v391
    %v413 = vpop.f32.mrf.mxu0
    %v414 = vadd.f32 %v389, %v413
    %415 = vmatmul.f32.gmra.mxu0 %v394
    %v416 = vpop.f32.mrf.mxu0
    %v417 = vadd.f32 %v389, %v416
    %418 = vdwg.mxu0
    %v419 = vadd.f32 %v27, %v414
    %v420 = vadd.f32 %v28, %v417
    %v421 = vsel %vm71, %v419, 0.0
    %422 = vadd.xlane.f32.xlu0 %v421
    %v423 = vpop.xlane.xlu0 %422
    %v424 = vsel %vm71, %v420, 0.0
    %425 = vadd.xlane.f32.xlu0 %v424
    %v426 = vpop.xlane.xlu0 %425
    %v427 = vrcp.pop 32.0
    %v428 = vmul.f32 32.0, %v427
    %v429 = vsub.f32 1.0, %v428
    %v430 = vmul.f32 %v427, %v429
    %v431 = vadd.f32 %v427, %v430
    %vm432 = vweird.f32 %v427
    %v433 = vsel %vm432, %v427, %v431
    %v434 = vmul.f32 %v423, %v433
    %v435 = vmul.f32 %v426, %v433
    %v436 = vsub.f32 %v419, %v434
    %v437 = vsub.f32 %v420, %v435
    %v438 = vmul.f32 %v436, %v436
    %v439 = vmul.f32 %v437, %v437
    %v440 = vsel %vm71, %v438, 0.0
    %441 = vadd.xlane.f32.xlu0 %v440
    %v442 = vpop.xlane.xlu0 %441
    %v443 = vsel %vm71, %v439, 0.0
    %444 = vadd.xlane.f32.xlu0 %v443
    %v445 = vpop.xlane.xlu0 %444
    %v446 = vmul.f32 %v442, %v433
    %v447 = vmul.f32 %v445, %v433
    %v448 = vadd.f32 %v446, 1e-05
    %v449 = vadd.f32 %v447, 1e-05
    %v450 = vrsqrt.pop %v448
    %v451 = vmul.f32 %v450, %v448
    %v452 = vmul.f32 %v451, %v450
    %v453 = vmul.f32 0.5, %v452
    %v454 = vsub.f32 1.5, %v453
    %v455 = vmul.f32 %v450, %v454
    %vm456 = vweird.f32 %v448
    %vm457 = vweird.f32 %v450
    %vm458 = vmor %vm456, %vm457
    %v459 = vsel %vm458, %v450, %v455
    %v460 = vrsqrt.pop %v449
    %v461 = vmul.f32 %v460, %v449
    %v462 = vmul.f32 %v461, %v460
    %v463 = vmul.f32 0.5, %v462
    %v464 = vsub.f32 1.5, %v463
    %v465 = vmul.f32 %v460, %v464
    %vm466 = vweird.f32 %v449
    %vm467 = vweird.f32 %v460
    %vm468 = vmor %vm466, %vm467
    %v469 = vsel %vm468, %v460, %v465
    %v470 = vmul.f32 %v436, %v459
    %v471 = vmul.f32 %v437, %v469
    %v472 = vperm.slane %v69, 2
    %v473 = vmul.f32 %v470, %v472
    %v474 = vmul.f32 %v471, %v472
    %v475 = vperm.slane %v69, 3
    %v476 = vadd.f32 %v473, %v475
    %v477 = vadd.f32 %v474, %v475
    %v478 = vperm.slane %v69, 4
    %v480 = vsel %vm71, %v476, 0
    %v483 = vsel %vm71, %v477, 0
    %485 = vmatpush.msra.mxu0 0.0
    %486 = vmatpush.msra.mxu0 0.0
    %487 = vmatpush.msra.mxu0 0.0
    %488 = vmatpush.msra.mxu0 0.0
    %489 = vmatpush.msra.mxu0 0.0
    %490 = vmatpush.msra.mxu0 0.0
    %491 = vmatpush.msra.mxu0 0.0
    %492 = vmatpush.msra.mxu0 0.0
    %493 = vmatpush.msra.mxu0 0.0
    %494 = vmatpush.msra.mxu0 0.0
    %495 = vmatpush.msra.mxu0 0.0
    %496 = vmatpush.msra.mxu0 0.0
    %497 = vmatpush.msra.mxu0 %v44
    %498 = vmatpush.msra.mxu0 %v43
    %499 = vmatpush.msra.mxu0 %v42
    %500 = vmatpush.msra.mxu0 %v41
    %501 = vmatmul.f32.gmra.mxu0 %v480
    %v502 = vpop.f32.mrf.mxu0
    %v503 = vadd.f32 %v478, %v502
    %504 = vmatmul.f32.gmra.mxu0 %v483
    %v505 = vpop.f32.mrf.mxu0
    %v506 = vadd.f32 %v478, %v505
    %507 = vdwg.mxu0
    %v508 = vmax.f32 %v503, 0.0
    %v509 = vmax.f32 %v506, 0.0
    %v510 = vperm.slane %v69, 5
    %v512 = vsel %vm254, %v508, 0
    %v515 = vsel %vm254, %v509, 0
    %517 = vmatpush.msra.mxu0 0.0
    %518 = vmatpush.msra.mxu0 0.0
    %519 = vmatpush.msra.mxu0 0.0
    %520 = vmatpush.msra.mxu0 0.0
    %521 = vmatpush.msra.mxu0 0.0
    %522 = vmatpush.msra.mxu0 0.0
    %523 = vmatpush.msra.mxu0 0.0
    %524 = vmatpush.msra.mxu0 0.0
    %525 = vmatpush.msra.mxu0 %v52
    %526 = vmatpush.msra.mxu0 %v51
    %527 = vmatpush.msra.mxu0 %v50
    %528 = vmatpush.msra.mxu0 %v49
    %529 = vmatpush.msra.mxu0 %v48
    %530 = vmatpush.msra.mxu0 %v47
    %531 = vmatpush.msra.mxu0 %v46
    %532 = vmatpush.msra.mxu0 %v45
    %533 = vmatmul.f32.gmra.mxu0 %v512
    %v534 = vpop.f32.mrf.mxu0
    %v535 = vadd.f32 %v510, %v534
    %536 = vmatmul.f32.gmra.mxu0 %v515
    %v537 = vpop.f32.mrf.mxu0
    %v538 = vadd.f32 %v510, %v537
    %539 = vdwg.mxu0
    %v540 = vadd.f32 %v476, %v535
    %v541 = vadd.f32 %v477, %v538
    %v542 = vsel %vm71, %v540, 0.0
    %543 = vadd.xlane.f32.xlu0 %v542
    %v544 = vpop.xlane.xlu0 %543
    %v545 = vsel %vm71, %v541, 0.0
    %546 = vadd.xlane.f32.xlu0 %v545
    %v547 = vpop.xlane.xlu0 %546
    %v548 = vmul.f32 %v544, %v433
    %v549 = vmul.f32 %v547, %v433
    %v550 = vsub.f32 %v540, %v548
    %v551 = vsub.f32 %v541, %v549
    %v552 = vmul.f32 %v550, %v550
    %v553 = vmul.f32 %v551, %v551
    %v554 = vsel %vm71, %v552, 0.0
    %555 = vadd.xlane.f32.xlu0 %v554
    %v556 = vpop.xlane.xlu0 %555
    %v557 = vsel %vm71, %v553, 0.0
    %558 = vadd.xlane.f32.xlu0 %v557
    %v559 = vpop.xlane.xlu0 %558
    %v560 = vmul.f32 %v556, %v433
    %v561 = vmul.f32 %v559, %v433
    %v562 = vadd.f32 %v560, 1e-05
    %v563 = vadd.f32 %v561, 1e-05
    %v564 = vrsqrt.pop %v562
    %v565 = vmul.f32 %v564, %v562
    %v566 = vmul.f32 %v565, %v564
    %v567 = vmul.f32 0.5, %v566
    %v568 = vsub.f32 1.5, %v567
    %v569 = vmul.f32 %v564, %v568
    %vm570 = vweird.f32 %v562
    %vm571 = vweird.f32 %v564
    %vm572 = vmor %vm570, %vm571
    %v573 = vsel %vm572, %v564, %v569
    %v574 = vrsqrt.pop %v563
    %v575 = vmul.f32 %v574, %v563
    %v576 = vmul.f32 %v575, %v574
    %v577 = vmul.f32 0.5, %v576
    %v578 = vsub.f32 1.5, %v577
    %v579 = vmul.f32 %v574, %v578
    %vm580 = vweird.f32 %v563
    %vm581 = vweird.f32 %v574
    %vm582 = vmor %vm580, %vm581
    %v583 = vsel %vm582, %v574, %v579
    %v584 = vmul.f32 %v550, %v573
    %v585 = vmul.f32 %v551, %v583
    %v586 = vperm.slane %v69, 6
    %v587 = vmul.f32 %v584, %v586
    %v588 = vmul.f32 %v585, %v586
    %v589 = vperm.slane %v69, 7
    %v590 = vadd.f32 %v587, %v589
    %v591 = vadd.f32 %v588, %v589
    %v592 = vsel %vm71, %v590, %v384
    %v593 = vsel %vm71, %v591, %v387
    %vm594 = vcmask 326656
    %595 = vst.msk [vmem:[%s2] sm:$0xff] %vm594, %v592
    %596 = vst.msk [vmem:[%s2 + $0x8] sm:$0xff] %vm594, %v593
    // Predicated region
    $region14: #{cross_attention_block.1} parent=1 // pred_check
      _
    $region15: #{cross_attention_block.1} parent=1 // pred_check_branch
      %598 = sbr.rel (0) target = $region17
    $region16: #{cross_attention_block.1} parent=1 // pred_region
      _
    $region17: #{cross_attention_block.1} parent=1 // pred_fallthru
      _
    // Predicated region
    $region18: #{cross_attention_block.1} parent=1 // pred_check
      _
    $region19: #{cross_attention_block.1} parent=1 // pred_check_branch
      %600 = sbr.rel (0) target = $region21
    $region20: #{cross_attention_block.1} parent=1 // pred_region
      _
    $region21: #{cross_attention_block.1} parent=1 // pred_fallthru
      _
    %601 = vsyncpa [#allocation3], 1

</llo_original>
